<compile_context>
chip_gen: v7x
topology: tpu7x:2x2x1
jax: 0.10.0
libtpu: 0.0.40
codegen_flags: <defaults>
</compile_context>

<pallas_src>
import jax
import jax.numpy as jnp
from jax import lax
from jax.experimental import pallas as pl
from jax.experimental.pallas import tpu as pltpu


# --------------------------------- helpers -----------------------------------

def _round_up(x, m):
    return ((x + m - 1) // m) * m


def _pad_axis(a, axis, target):
    pad = target - a.shape[axis]
    if pad <= 0:
        return a
    widths = [(0, 0)] * a.ndim
    widths[axis] = (0, pad)
    return jnp.pad(a, widths)


# ---------------- fused Linear + has_spike (MXU) kernel ----------------------

def _make_linear_hs_kernel(batch, m_actual):
    """batch: B (rows t*B are batch element 0); m_actual: unpadded row count."""

    def kernel(x_ref, w_ref, b_ref, y_ref, hs_ref, acc_ref):
        i = pl.program_id(0)
        j = pl.program_id(1)
        k = pl.program_id(2)
        nk = pl.num_programs(2)
        tm = x_ref.shape[0]

        @pl.when(k == 0)
        def _():
            acc_ref[...] = jnp.zeros_like(acc_ref)
            hs_ref[...] = jnp.zeros_like(hs_ref)

        x = x_ref[...]
        if x.dtype != jnp.bfloat16:          # static; per-tile cast (no HBM pass)
            x = x.astype(jnp.bfloat16)
        w = w_ref[...]
        if w.dtype != jnp.bfloat16:
            w = w.astype(jnp.bfloat16)
        acc_ref[...] += jnp.dot(x, w, preferred_element_type=jnp.float32)

        # has_spike row mask: global rows t*B (batch element 0 of each timestep),
        # excluding padding rows.
        rows = i * tm + lax.broadcasted_iota(jnp.int32, (tm, 1), 0)
        row_mask = jnp.logical_and(rows % batch == 0, rows < m_actual)

        # |x| partials: x tiles depend only on (i, k) -> accumulate once (j == 0).
        @pl.when(j == 0)
        def _():
            ax = jnp.where(row_mask, jnp.abs(x.astype(jnp.float32)), 0.0)
            xs = jnp.sum(ax, axis=0, keepdims=True)          # (1, tk)
            xs = xs.reshape(-1, 128).sum(axis=0, keepdims=True)  # (1, 128)
            hs_ref[0, 0, 0:1, :] += xs

        @pl.when(k == nk - 1)
        def _():
            y = acc_ref[...] + b_ref[...].astype(jnp.float32)
            y_ref[...] = y.astype(y_ref.dtype)
            ay = jnp.where(row_mask, jnp.abs(y), 0.0)
            ys = jnp.sum(ay, axis=0, keepdims=True)              # (1, tn)
            ys = ys.reshape(-1, 128).sum(axis=0, keepdims=True)  # (1, 128)
            hs_ref[0, 0, 1:2, :] += ys

    return kernel


def linear_pallas(x2d, w_t, b, batch):
    """y = x2d @ w_t + b, plus fused has_spike abs-sums.

    x2d:   (M, K) spike activations (bf16 preferred; others cast per-tile)
    w_t:   (K, N) weight, pre-transposed (bf16 preferred, cast once by caller)
    b:     (1, N) f32 bias
    batch: B; rows t*B of x2d / y are the "batch element 0" rows whose abs-sum
           feeds the has_spike checks of the original module.

    Returns (y (M, N) f32, hs (2,) f32 = [sum|x[t*B]|, sum|y[t*B]|]).
    """
    M, K = x2d.shape
    K2, N = w_t.shape
    assert K == K2 and b.shape == (1, N)

    # ----- lane-dense tile selection + zero padding (no divisibility asserts) -
    Kp = _round_up(K, 128)
    Np = _round_up(N, 128)
    tk = Kp if Kp <= 1024 else 1024      # v5e: fewest K steps possible
    Kp = _round_up(Kp, tk)
    tn = Np if Np <= 1024 else 1024
    Np = _round_up(Np, tn)

    m16 = _round_up(max(M, 16), 16)      # bf16 sublane-pack friendly rows
    if m16 <= 512:
        tm = m16                         # single row block (small/toy M)
    else:
        # >= 2 row blocks so v7x's 2 TensorCores both get work; blocks <= 512.
        nb = -(-m16 // 512)
        tm = _round_up(-(-m16 // nb), 16)
    Mp = _round_up(m16, tm)

    x_p = _pad_axis(_pad_axis(x2d, 0, Mp), 1, Kp)
    w_p = _pad_axis(_pad_axis(w_t, 0, Kp), 1, Np)
    b_p = _pad_axis(b, 1, Np)

    gi, gj, gk = Mp // tm, Np // tn, Kp // tk

    xb = x_p.dtype.itemsize
    wb = w_p.dtype.itemsize
    cost = pl.CostEstimate(
        flops=2 * Mp * Np * Kp,
        transcendentals=0,
        bytes_accessed=Mp * Kp * xb + Kp * Np * wb + Np * 4 + Mp * Np * 4)

    # double-buffered x, w, y + f32 accumulator + bias + hs partials
    vmem_est = (2 * tm * tk * xb + 2 * tk * tn * wb + 2 * tm * tn * 4
                + tm * tn * 4 + 2 * tn * 4 + 2 * 8 * 128 * 4)
    vmem_limit = int(min(48 * 1024 * 1024, max(2 * vmem_est, 16 * 1024 * 1024)))

    kernel = _make_linear_hs_kernel(batch, M)

    y_p, hs_p = pl.pallas_call(
        kernel,
        out_shape=(jax.ShapeDtypeStruct((Mp, Np), jnp.float32),
                   jax.ShapeDtypeStruct((gi, gj, 8, 128), jnp.float32)),
        grid_spec=pltpu.PrefetchScalarGridSpec(
            num_scalar_prefetch=0,
            grid=(gi, gj, gk),
            in_specs=[
                pl.BlockSpec((tm, tk), lambda i, j, k: (i, k)),
                pl.BlockSpec((tk, tn), lambda i, j, k: (k, j)),
                pl.BlockSpec((1, tn), lambda i, j, k: (0, j)),
            ],
            out_specs=[
                pl.BlockSpec((tm, tn), lambda i, j, k: (i, j)),
                pl.BlockSpec((1, 1, 8, 128), lambda i, j, k: (i, j, 0, 0)),
            ],
            scratch_shapes=[pltpu.VMEM((tm, tn), jnp.float32)]),
        compiler_params=pltpu.CompilerParams(
            dimension_semantics=("parallel", "parallel", "arbitrary"),
            vmem_limit_bytes=vmem_limit),
        cost_estimate=cost,
    )(x_p, w_p, b_p)

    y = y_p[:M, :N] if (Mp != M or Np != N) else y_p
    hs_in = hs_p[:, :, 0, :].sum()
    hs_out = hs_p[:, :, 1, :].sum()
    return y, jnp.stack([hs_in, hs_out])


# ---------------------------- jitted forward pass ----------------------------

def _forward_impl(spikes, w_bf, b):
    """Batched equivalent of T sequential `forward(x_t)` calls of the module.

    spikes: (T, B, N_in). The wrapped Linear is timestep-independent, so folding
    T into the row dim is exact. Returns (y (T,B,N_out), hs (2,)).
    """
    T, B, N_in = spikes.shape
    N_out = w_bf.shape[1]
    y2d, hs = linear_pallas(spikes.reshape(T * B, N_in), w_bf, b, batch=B)
    return y2d.reshape(T, B, N_out), hs


_forward = jax.jit(_forward_impl)


# --------------------------- wrapper module (JAX) ----------------------------

class SaveModuleInout:
    """JAX/Pallas port of `save_module_inout` wrapping a Linear (`self.m`)."""

    def __init__(self, weight, bias, T, name="fc"):
        # nn.Linear layout: weight (N_out, N_in), bias (N_out,).
        # Cast the weight to bf16 ONCE here (not per forward call).
        self.w_bf = jnp.asarray(weight).T.astype(jnp.bfloat16)   # (N_in, N_out)
        self.b = jnp.asarray(bias).reshape(1, -1).astype(jnp.float32)
        self.T = T
        self.name = name
        self.t = 0
        self.has_spike = None
        # Original __init__ sets first=False (pure passthrough); enabled here so
        # the accumulation / has_spike / save path is exercised.
        self.first = True

    def __call__(self, x_all):
        """x_all: (T, B, N_in) — all T timesteps at once (batched equivalent of
        the original per-timestep forward loop). Returns (T, B, N_out) f32."""
        T, B, N_in = x_all.shape
        assert T == self.T
        self.t += T

        y, hs = _forward(x_all, self.w_bf, self.b)

        if self.first and self.t == self.T:
            # Single device->host sync for BOTH has_spike checks (fused in-kernel).
            hs_in, hs_out = (float(v) for v in jax.device_get(hs))
            self.has_spike = (hs_in, hs_out)
            assert hs_in != 0.0, "some errors in input, all the element are 0!!!"
            assert hs_out != 0.0, "some errors in input, all the element are 0!!!"
            # TODO(synk): torch.save of the stacked activations x_all[:, :1, :]
            # (accu) / y[:, :1, :] (accu1), the weight / bias, and the
            # torch.distributed.get_rank() gating are host-side I/O with no
            # Pallas equivalent; intentionally skipped.
            self.first = False
        return y


# ---------------------------------- main -------------------------------------

if __name__ == "__main__":
    import numpy as np

    key = jax.random.PRNGKey(0)

    # ----- case 1: lane-dense, divisible shapes (typical SNN FC) -------------
    T, B, N_IN, N_OUT = 4, 8, 128, 128
    kw, kb, kx, kw2, kb2, kx2 = jax.random.split(key, 6)

    weight = jax.random.normal(kw, (N_OUT, N_IN), dtype=jnp.float32) * 0.05
    bias = jax.random.normal(kb, (N_OUT,), dtype=jnp.float32) * 0.01
    mod = SaveModuleInout(weight, bias, T)

    # Binary-SNN spike inputs produced directly in bf16 ({0,1} is exact in bf16).
    spikes = (jax.random.uniform(kx, (T, B, N_IN)) < 0.5).astype(jnp.bfloat16)

    y = mod(spikes)
    y = jax.block_until_ready(y)

    # Reference with the same bf16-rounded operands (f32 accumulate).
    x_f32 = spikes.astype(jnp.float32)
    w_f32 = mod.w_bf.astype(jnp.float32)
    ref = jnp.einsum("tbk,kn->tbn", x_f32, w_f32) + mod.b
    assert y.shape == (T, B, N_OUT)
    assert jnp.allclose(y, ref, atol=1e-3, rtol=1e-3), "mismatch vs reference Linear"

    # Fused has_spike values vs reference.
    _, hs = _forward(spikes, mod.w_bf, mod.b)
    hs = np.asarray(jax.device_get(hs))
    hs_in_ref = float(jnp.abs(x_f32[:, 0, :]).sum())
    hs_out_ref = float(jnp.abs(ref[:, 0, :]).sum())
    assert np.isclose(hs[0], hs_in_ref, rtol=1e-3, atol=1e-2), "has_spike(in) mismatch"
    assert np.isclose(hs[1], hs_out_ref, rtol=1e-3, atol=1e-2), "has_spike(out) mismatch"

    # ----- case 2: ragged shapes (exercises the padding path) ----------------
    T2, B2, N_IN2, N_OUT2 = 3, 5, 96, 160
    weight2 = jax.random.normal(kw2, (N_OUT2, N_IN2), dtype=jnp.float32) * 0.05
    bias2 = jax.random.normal(kb2, (N_OUT2,), dtype=jnp.float32) * 0.01
    mod2 = SaveModuleInout(weight2, bias2, T2)
    spikes2 = (jax.random.uniform(kx2, (T2, B2, N_IN2)) < 0.5).astype(jnp.bfloat16)

    y2 = jax.block_until_ready(mod2(spikes2))
    ref2 = (jnp.einsum("tbk,kn->tbn", spikes2.astype(jnp.float32),
                       mod2.w_bf.astype(jnp.float32)) + mod2.b)
    assert y2.shape == (T2, B2, N_OUT2)
    assert jnp.allclose(y2, ref2, atol=1e-3, rtol=1e-3), "mismatch (ragged case)"

    print("KERNEL_OK")
</pallas_src>

<mosaic_0001>
module attributes {stable_mosaic.version = 11 : i64} {
  func.func @kernel(%arg0: i32, %arg1: i32, %arg2: i32, %arg3: memref<32x128xbf16, #tpu.memory_space<vmem>>, %arg4: memref<128x128xbf16, #tpu.memory_space<vmem>>, %arg5: memref<1x128xf32, #tpu.memory_space<vmem>>, %arg6: memref<32x128xf32, #tpu.memory_space<vmem>>, %arg7: memref<1x1x8x128xf32, #tpu.memory_space<vmem>>, %arg8: memref<32x128xf32, #tpu.memory_space<vmem>>) attributes {dimension_semantics = [#tpu.dimension_semantics<parallel>, #tpu.dimension_semantics<parallel>, #tpu.dimension_semantics<arbitrary>], iteration_bounds = array<i64: 1, 1, 1>, scalar_prefetch = 0 : i64, scratch_operands = 1 : i64, tpu.core_type = #tpu.core_type<tc>, window_params = [{transform_indices = @transform_0, window_bounds = array<i64: 32, 128>}, {transform_indices = @transform_1, window_bounds = array<i64: 128, 128>}, {transform_indices = @transform_2, window_bounds = array<i64: 1, 128>}, {transform_indices = @transform_3, window_bounds = array<i64: 32, 128>}, {transform_indices = @transform_4, window_bounds = array<i64: 1, 1, 8, 128>}]} {
    %c0_i32 = arith.constant 0 : i32
    %0 = arith.cmpi eq, %arg2, %c0_i32 : i32
    %1 = arith.extui %0 : i1 to i32
    %c0_i32_0 = arith.constant 0 : i32
    %2 = arith.cmpi ne, %1, %c0_i32_0 : i32
    scf.if %2 {
      %cst_18 = arith.constant 0.000000e+00 : f32
      %40 = vector.broadcast %cst_18 : f32 to vector<32x128xf32>
      %c0_19 = arith.constant 0 : index
      %c0_20 = arith.constant 0 : index
      %41 = vector.load %arg8[%c0_19, %c0_20] : memref<32x128xf32, #tpu.memory_space<vmem>>, vector<32x128xf32>
      tpu.vector_store %arg8[%c0_19, %c0_20], %40 {strides = array<i32>} : memref<32x128xf32, #tpu.memory_space<vmem>>, vector<32x128xf32>,
      %cst_21 = arith.constant 0.000000e+00 : f32
      %42 = vector.broadcast %cst_21 : f32 to vector<1x1x8x128xf32>
      %c0_22 = arith.constant 0 : index
      %c0_23 = arith.constant 0 : index
      %c0_24 = arith.constant 0 : index
      %c0_25 = arith.constant 0 : index
      %43 = vector.load %arg7[%c0_22, %c0_23, %c0_24, %c0_25] : memref<1x1x8x128xf32, #tpu.memory_space<vmem>>, vector<1x1x8x128xf32>
      tpu.vector_store %arg7[%c0_22, %c0_23, %c0_24, %c0_25], %42 {strides = array<i32>} : memref<1x1x8x128xf32, #tpu.memory_space<vmem>>, vector<1x1x8x128xf32>,
    } else {
    }
    %c0 = arith.constant 0 : index
    %c0_1 = arith.constant 0 : index
    %3 = vector.load %arg3[%c0, %c0_1] : memref<32x128xbf16, #tpu.memory_space<vmem>>, vector<32x128xbf16>
    %c0_2 = arith.constant 0 : index
    %c0_3 = arith.constant 0 : index
    %4 = vector.load %arg4[%c0_2, %c0_3] : memref<128x128xbf16, #tpu.memory_space<vmem>>, vector<128x128xbf16>
    %c0_4 = arith.constant 0 : index
    %c0_5 = arith.constant 0 : index
    %5 = vector.load %arg8[%c0_4, %c0_5] : memref<32x128xf32, #tpu.memory_space<vmem>>, vector<32x128xf32>
    %cst = arith.constant dense<0.000000e+00> : vector<32x128xf32>
    %6 = tpu.matmul %3, %4, %cst {dimension_numbers = #tpu.dot_dimension_numbers<[1], [0], [0], [1], [0, 0, 1, 1], [], []>} : vector<32x128xbf16>, vector<128x128xbf16>, vector<32x128xf32> -> vector<32x128xf32>
    %7 = arith.addf %5, %6 : vector<32x128xf32>
    %c0_6 = arith.constant 0 : index
    %c0_7 = arith.constant 0 : index
    %8 = vector.load %arg8[%c0_6, %c0_7] : memref<32x128xf32, #tpu.memory_space<vmem>>, vector<32x128xf32>
    tpu.vector_store %arg8[%c0_6, %c0_7], %7 {strides = array<i32>} : memref<32x128xf32, #tpu.memory_space<vmem>>, vector<32x128xf32>,
    %c32_i32 = arith.constant 32 : i32
    %9 = arith.muli %arg0, %c32_i32 : i32
    %10 = tpu.iota {dimensions = array<i32: 0>} : vector<32x1xi32>
    %11 = vector.broadcast %9 : i32 to vector<32x1xi32>
    %12 = arith.addi %11, %10 : vector<32x1xi32>
    %c8_i32 = arith.constant 8 : i32
    %c0_i32_8 = arith.constant 0 : i32
    %13 = arith.cmpi eq, %c8_i32, %c0_i32_8 : i32
    %c1_i32 = arith.constant 1 : i32
    %14 = arith.select %13, %c1_i32, %c8_i32 : i32
    %15 = vector.broadcast %14 : i32 to vector<32x1xi32>
    %16 = arith.remsi %12, %15 : vector<32x1xi32>
    %c0_i32_9 = arith.constant 0 : i32
    %17 = vector.broadcast %c0_i32_9 : i32 to vector<32x1xi32>
    %18 = arith.cmpi ne, %16, %17 : vector<32x1xi32>
    %c0_i32_10 = arith.constant 0 : i32
    %19 = vector.broadcast %c0_i32_10 : i32 to vector<32x1xi32>
    %20 = arith.cmpi slt, %16, %19 : vector<32x1xi32>
    %c0_i32_11 = arith.constant 0 : i32
    %21 = arith.cmpi slt, %14, %c0_i32_11 : i32
    %22 = vector.broadcast %21 : i1 to vector<32x1xi1>
    %23 = vector.broadcast %22 : vector<32x1xi1> to vector<32x1xi1>
    %24 = arith.xori %20, %23 : vector<32x1xi1>
    %25 = arith.andi %24, %18 : vector<32x1xi1>
    %26 = vector.broadcast %14 : i32 to vector<32x1xi32>
    %27 = arith.addi %16, %26 : vector<32x1xi32>
    %28 = arith.select %25, %27, %16 : vector<32x1xi1>, vector<32x1xi32>
    %c0_i32_12 = arith.constant 0 : i32
    %29 = vector.broadcast %c0_i32_12 : i32 to vector<32x1xi32>
    %30 = arith.cmpi eq, %28, %29 : vector<32x1xi32>
    %c32_i32_13 = arith.constant 32 : i32
    %31 = vector.broadcast %c32_i32_13 : i32 to vector<32x1xi32>
    %32 = arith.cmpi slt, %12, %31 : vector<32x1xi32>
    %33 = arith.andi %30, %32 : vector<32x1xi1>
    %c0_i32_14 = arith.constant 0 : i32
    %34 = arith.cmpi eq, %arg1, %c0_i32_14 : i32
    %35 = arith.extui %34 : i1 to i32
    %c0_i32_15 = arith.constant 0 : i32
    %36 = arith.cmpi ne, %35, %c0_i32_15 : i32
    scf.if %36 {
      %40 = arith.extf %3 : vector<32x128xbf16> to vector<32x128xf32>
      %41 = math.absf %40 : vector<32x128xf32>
      %cst_18 = arith.constant 0.000000e+00 : f32
      %42 = vector.shape_cast %33 : vector<32x1xi1> to vector<32x1xi1>
      %43 = vector.broadcast %42 : vector<32x1xi1> to vector<32x128xi1>
      %44 = vector.broadcast %cst_18 : f32 to vector<32x128xf32>
      %45 = arith.select %43, %41, %44 : vector<32x128xi1>, vector<32x128xf32>
      %cst_19 = arith.constant dense<0.000000e+00> : vector<128xf32>
      %46 = vector.multi_reduction <add>, %45, %cst_19 [0] : vector<32x128xf32> to vector<128xf32>
      %47 = vector.shape_cast %46 : vector<128xf32> to vector<1x128xf32>
      %cst_20 = arith.constant dense<0.000000e+00> : vector<128xf32>
      %48 = vector.multi_reduction <add>, %47, %cst_20 [0] : vector<1x128xf32> to vector<128xf32>
      %49 = vector.shape_cast %48 : vector<128xf32> to vector<1x128xf32>
      %c0_21 = arith.constant 0 : index
      %c0_22 = arith.constant 0 : index
      %c0_23 = arith.constant 0 : index
      %c0_24 = arith.constant 0 : index
      %50 = vector.load %arg7[%c0_21, %c0_22, %c0_23, %c0_24] : memref<1x1x8x128xf32, #tpu.memory_space<vmem>>, vector<1x1x1x128xf32>
      %51 = vector.shape_cast %50 : vector<1x1x1x128xf32> to vector<1x128xf32>
      %52 = arith.addf %51, %49 : vector<1x128xf32>
      %c0_25 = arith.constant 0 : index
      %c0_26 = arith.constant 0 : index
      %c0_27 = arith.constant 0 : index
      %c0_28 = arith.constant 0 : index
      %53 = vector.load %arg7[%c0_25, %c0_26, %c0_27, %c0_28] : memref<1x1x8x128xf32, #tpu.memory_space<vmem>>, vector<1x1x1x128xf32>
      %54 = vector.shape_cast %53 : vector<1x1x1x128xf32> to vector<1x128xf32>
      %55 = vector.shape_cast %52 : vector<1x128xf32> to vector<1x1x1x128xf32>
      tpu.vector_store %arg7[%c0_25, %c0_26, %c0_27, %c0_28], %55 {strides = array<i32>} : memref<1x1x8x128xf32, #tpu.memory_space<vmem>>, vector<1x1x1x128xf32>,
    } else {
    }
    %c0_i32_16 = arith.constant 0 : i32
    %37 = arith.cmpi eq, %arg2, %c0_i32_16 : i32
    %38 = arith.extui %37 : i1 to i32
    %c0_i32_17 = arith.constant 0 : i32
    %39 = arith.cmpi ne, %38, %c0_i32_17 : i32
    scf.if %39 {
      %c0_18 = arith.constant 0 : index
      %c0_19 = arith.constant 0 : index
      %40 = vector.load %arg8[%c0_18, %c0_19] : memref<32x128xf32, #tpu.memory_space<vmem>>, vector<32x128xf32>
      %c0_20 = arith.constant 0 : index
      %c0_21 = arith.constant 0 : index
      %41 = vector.load %arg5[%c0_20, %c0_21] : memref<1x128xf32, #tpu.memory_space<vmem>>, vector<1x128xf32>
      %42 = vector.broadcast %41 : vector<1x128xf32> to vector<32x128xf32>
      %43 = arith.addf %40, %42 : vector<32x128xf32>
      %c0_22 = arith.constant 0 : index
      %c0_23 = arith.constant 0 : index
      %44 = vector.load %arg6[%c0_22, %c0_23] : memref<32x128xf32, #tpu.memory_space<vmem>>, vector<32x128xf32>
      tpu.vector_store %arg6[%c0_22, %c0_23], %43 {strides = array<i32>} : memref<32x128xf32, #tpu.memory_space<vmem>>, vector<32x128xf32>,
      %45 = math.absf %43 : vector<32x128xf32>
      %cst_24 = arith.constant 0.000000e+00 : f32
      %46 = vector.shape_cast %33 : vector<32x1xi1> to vector<32x1xi1>
      %47 = vector.broadcast %46 : vector<32x1xi1> to vector<32x128xi1>
      %48 = vector.broadcast %cst_24 : f32 to vector<32x128xf32>
      %49 = arith.select %47, %45, %48 : vector<32x128xi1>, vector<32x128xf32>
      %cst_25 = arith.constant dense<0.000000e+00> : vector<128xf32>
      %50 = vector.multi_reduction <add>, %49, %cst_25 [0] : vector<32x128xf32> to vector<128xf32>
      %51 = vector.shape_cast %50 : vector<128xf32> to vector<1x128xf32>
      %cst_26 = arith.constant dense<0.000000e+00> : vector<128xf32>
      %52 = vector.multi_reduction <add>, %51, %cst_26 [0] : vector<1x128xf32> to vector<128xf32>
      %53 = vector.shape_cast %52 : vector<128xf32> to vector<1x128xf32>
      %c0_27 = arith.constant 0 : index
      %c0_28 = arith.constant 0 : index
      %c1 = arith.constant 1 : index
      %c0_29 = arith.constant 0 : index
      %54 = vector.load %arg7[%c0_27, %c0_28, %c1, %c0_29] : memref<1x1x8x128xf32, #tpu.memory_space<vmem>>, vector<1x1x1x128xf32>
      %55 = vector.shape_cast %54 : vector<1x1x1x128xf32> to vector<1x128xf32>
      %56 = arith.addf %55, %53 : vector<1x128xf32>
      %c0_30 = arith.constant 0 : index
      %c0_31 = arith.constant 0 : index
      %c1_32 = arith.constant 1 : index
      %c0_33 = arith.constant 0 : index
      %57 = vector.load %arg7[%c0_30, %c0_31, %c1_32, %c0_33] : memref<1x1x8x128xf32, #tpu.memory_space<vmem>>, vector<1x1x1x128xf32>
      %58 = vector.shape_cast %57 : vector<1x1x1x128xf32> to vector<1x128xf32>
      %59 = vector.shape_cast %56 : vector<1x128xf32> to vector<1x1x1x128xf32>
      tpu.vector_store %arg7[%c0_30, %c0_31, %c1_32, %c0_33], %59 {strides = array<i32>} : memref<1x1x8x128xf32, #tpu.memory_space<vmem>>, vector<1x1x1x128xf32>,
    } else {
    }
    return
  }
  func.func @transform_0(%arg0: i32, %arg1: i32, %arg2: i32) -> (i32, i32) {
    %c0_i32 = arith.constant 0 : i32
    return %arg0, %arg2 : i32, i32
  }
  func.func @transform_1(%arg0: i32, %arg1: i32, %arg2: i32) -> (i32, i32) {
    %c0_i32 = arith.constant 0 : i32
    return %arg2, %arg1 : i32, i32
  }
  func.func @transform_2(%arg0: i32, %arg1: i32, %arg2: i32) -> (i32, i32) {
    %c0_i32 = arith.constant 0 : i32
    %c0_i32_0 = arith.constant 0 : i32
    return %c0_i32, %arg1 : i32, i32
  }
  func.func @transform_3(%arg0: i32, %arg1: i32, %arg2: i32) -> (i32, i32) {
    %c0_i32 = arith.constant 0 : i32
    return %arg0, %arg1 : i32, i32
  }
  func.func @transform_4(%arg0: i32, %arg1: i32, %arg2: i32) -> (i32, i32, i32, i32) {
    %c0_i32 = arith.constant 0 : i32
    %c0_i32_0 = arith.constant 0 : i32
    %c0_i32_1 = arith.constant 0 : i32
    return %arg0, %arg1, %c0_i32, %c0_i32_0 : i32, i32, i32, i32
  }
}

</mosaic_0001>

<llo_original>
// kernel: _forward_impl.1
$region0: #{_forward_impl.1}
  #allocation0 [shape = 'u32[]', space=smem, size = 0x4, offset = 0x4, fixed_abs, tag = 'smem constant byte address 0x4 - core index']
  #allocation1 [shape = 'u32[144,128]{1,0:T(1,128)}', space=vmem, size = 0x12000, scoped, tag = 'internal scratch']
  #allocation2 [shape = 'f32[32,128]{1,0:T(8,128)}', space=vmem, size = 0x4000, scoped, tag = 'scratch operand']
  %s0 = inlined_call_operand.hbm [shape: bf16[32,128], index: 0, kind: input, shape index: {}]
  %s1 = inlined_call_operand.hbm [shape: bf16[128,128], index: 1, kind: input, shape index: {}]
  %s2 = inlined_call_operand.vmem [shape: f32[1,128], index: 2, kind: input, shape index: {}]
  %s3 = inlined_call_operand.hbm [shape: f32[32,128], index: 3, kind: output, shape index: {0}]
  %s4 = inlined_call_operand.vmem [shape: f32[1,1,8,128], index: 4, kind: output, shape index: {1}]
  %5 = xla_tuple %s3, %s4
  %s6 = sld [smem:[#allocation0]]
  $region50: #{_forward_impl.1} parent=0
    _
  %s8 = ssub.s32 1, %s6
  %s9 = scalar_select 0, %s8, %s6
  $region1: #{_forward_impl.1} parent=0
    #allocation3 [shape = 'u8[8192]{0}', space=vmem, size = 0x2000, scoped, tag = 'input window, operand 0, single buffered']
    #allocation4 [shape = 's32[1]{0}', space=sflag, size = 0x4, scoped, tag = 'scoped memory for _forward_impl.1']
    #allocation5 [shape = 's32[1]{0}', space=sflag, size = 0x4, scoped, tag = 'scoped memory for _forward_impl.1']
    #allocation6 [shape = 'u8[32768]{0}', space=vmem, size = 0x8000, scoped, tag = 'input window, operand 1, single buffered']
    #allocation7 [shape = 's32[1]{0}', space=sflag, size = 0x4, scoped, tag = 'scoped memory for _forward_impl.1']
    #allocation8 [shape = 'u8[16384]{0}', space=vmem, size = 0x4000, scoped, tag = 'output window, operand 0, single buffered']
    %10 = vsyncpa [#allocation4], 0
    %11 = vsyncpa [#allocation7], 0
    %12 = vsyncpa [#allocation5], 0
    // Predicated region
    $region2: #{_forward_impl.1} parent=1 // pred_check
      _
    $region3: #{_forward_impl.1} parent=1 // pred_check_branch
      %14 = sbr.rel (0) target = $region5
    $region4: #{_forward_impl.1} parent=1 // pred_region
      %s16 = ssub.s32 256, 256
      %17 = vsyncadd [#allocation4], %s16
      %s18 = sshll.u32 [#allocation3], 4
      %s19 = int_to_ptr.vmem [resolvable:$true] %s18
      %24 = dma.hbm_to_vmem [thread:$0]  %s0, 256, %s19, [#allocation4], 64, 64, 4
    $region5: #{_forward_impl.1} parent=1 // pred_fallthru
      _
    // Predicated region
    $region6: #{_forward_impl.1} parent=1 // pred_check
      _
    $region7: #{_forward_impl.1} parent=1 // pred_check_branch
      %26 = sbr.rel (0) target = $region9
    $region8: #{_forward_impl.1} parent=1 // pred_region
      %s28 = ssub.s32 1024, 1024
      %29 = vsyncadd [#allocation7], %s28
      %s30 = sshll.u32 [#allocation6], 4
      %s31 = int_to_ptr.vmem [resolvable:$true] %s30
      %36 = dma.hbm_to_vmem [thread:$0]  %s1, 1024, %s31, [#allocation7], 64, 64, 4
    $region9: #{_forward_impl.1} parent=1 // pred_fallthru
      _
    // Predicated region
    $region10: #{_forward_impl.1} parent=1 // pred_check
      _
    $region11: #{_forward_impl.1} parent=1 // pred_check_branch
      %38 = sbr.rel (0) target = $region13
    $region12: #{_forward_impl.1} parent=1 // pred_region
      _
    $region13: #{_forward_impl.1} parent=1 // pred_fallthru
      _
    // Predicated region
    $region14: #{_forward_impl.1} parent=1 // pred_check
      _
    $region15: #{_forward_impl.1} parent=1 // pred_check_branch
      %40 = sbr.rel (0) target = $region17
    $region16: #{_forward_impl.1} parent=1 // pred_region
      %41 = dma.done [#allocation4], 256
    $region17: #{_forward_impl.1} parent=1 // pred_fallthru
      _
    // Predicated region
    $region18: #{_forward_impl.1} parent=1 // pred_check
      _
    $region19: #{_forward_impl.1} parent=1 // pred_check_branch
      %43 = sbr.rel (0) target = $region21
    $region20: #{_forward_impl.1} parent=1 // pred_region
      %44 = dma.done [#allocation7], 1024
    $region21: #{_forward_impl.1} parent=1 // pred_fallthru
      _
    %p46 = scmp.eq.s32.totalorder 0, 0
    // Predicated region
    $region22: #{_forward_impl.1} parent=1 // pred_check
      %p47 = pneg %p46
    $region23: #{_forward_impl.1} parent=1 // pred_check_branch
      %49 = sbr.rel (%p47) target = $region25
    $region24: #{_forward_impl.1} parent=1 // pred_region
      %50 = vst [vmem:[#allocation2] sm:$0xff] 0.0
      %51 = vst [vmem:[#allocation2 + $0x8] sm:$0xff] 0.0
      %52 = vst [vmem:[#allocation2 + $0x10] sm:$0xff] 0.0
      %53 = vst [vmem:[#allocation2 + $0x18] sm:$0xff] 0.0
      %54 = vst [vmem:[%s4] sm:$0xff] 0.0
    $region25: #{_forward_impl.1} parent=1 // pred_fallthru
      _
    %v55 = vld [vmem:[#allocation3] sm:$0xf]
    %v56 = vld [vmem:[#allocation3 + $0x4] sm:$0xf]
    %v57 = vld [vmem:[#allocation3 + $0x8] sm:$0xf]
    %v58 = vld [vmem:[#allocation3 + $0xc] sm:$0xf]
    %v59 = vld [vmem:[#allocation6] sm:$0xf]
    %v60 = vld [vmem:[#allocation6 + $0x4] sm:$0xf]
    %v61 = vld [vmem:[#allocation6 + $0x8] sm:$0xf]
    %v62 = vld [vmem:[#allocation6 + $0xc] sm:$0xf]
    %v63 = vld [vmem:[#allocation6 + $0x10] sm:$0xf]
    %v64 = vld [vmem:[#allocation6 + $0x14] sm:$0xf]
    %v65 = vld [vmem:[#allocation6 + $0x18] sm:$0xf]
    %v66 = vld [vmem:[#allocation6 + $0x1c] sm:$0xf]
    %v67 = vld [vmem:[#allocation6 + $0x20] sm:$0xf]
    %v68 = vld [vmem:[#allocation6 + $0x24] sm:$0xf]
    %v69 = vld [vmem:[#allocation6 + $0x28] sm:$0xf]
    %v70 = vld [vmem:[#allocation6 + $0x2c] sm:$0xf]
    %v71 = vld [vmem:[#allocation6 + $0x30] sm:$0xf]
    %v72 = vld [vmem:[#allocation6 + $0x34] sm:$0xf]
    %v73 = vld [vmem:[#allocation6 + $0x38] sm:$0xf]
    %v74 = vld [vmem:[#allocation6 + $0x3c] sm:$0xf]
    %v75 = vld [vmem:[#allocation2] sm:$0xff]
    %v76 = vld [vmem:[#allocation2 + $0x8] sm:$0xff]
    %v77 = vld [vmem:[#allocation2 + $0x10] sm:$0xff]
    %v78 = vld [vmem:[#allocation2 + $0x18] sm:$0xff]
    %v83 = vunpack.c.l.b16 %v55
    %v84 = vunpack.c.l.b16 %v56
    %v85 = vunpack.c.l.b16 %v57
    %v86 = vunpack.c.l.b16 %v58
    %v87 = vpack.c.b16 %v84, %v83
    %v88 = vpack.c.b16 %v86, %v85
    %v107 = vunpack.c.l.b16 %v59
    %v108 = vunpack.c.l.b16 %v60
    %v109 = vunpack.c.l.b16 %v61
    %v110 = vunpack.c.l.b16 %v62
    %v111 = vunpack.c.l.b16 %v63
    %v112 = vunpack.c.l.b16 %v64
    %v113 = vunpack.c.l.b16 %v65
    %v114 = vunpack.c.l.b16 %v66
    %v115 = vunpack.c.l.b16 %v67
    %v116 = vunpack.c.l.b16 %v68
    %v117 = vunpack.c.l.b16 %v69
    %v118 = vunpack.c.l.b16 %v70
    %v119 = vunpack.c.l.b16 %v71
    %v120 = vunpack.c.l.b16 %v72
    %v121 = vunpack.c.l.b16 %v73
    %v122 = vunpack.c.l.b16 %v74
    %v123 = vpack.c.b16 %v108, %v107
    %v124 = vpack.c.b16 %v110, %v109
    %v125 = vpack.c.b16 %v112, %v111
    %v126 = vpack.c.b16 %v114, %v113
    %v127 = vpack.c.b16 %v116, %v115
    %v128 = vpack.c.b16 %v118, %v117
    %v129 = vpack.c.b16 %v120, %v119
    %v130 = vpack.c.b16 %v122, %v121
    %139 = vmatprep.subr.bf16.mxu0 0
    %140 = vmatpush1.bf16.msra.mxu0 %v123
    %141 = vmatprep.subr.bf16.mxu0 0
    %142 = vmatpush1.bf16.msra.mxu0 %v124
    %143 = vmatprep.subr.bf16.mxu0 0
    %144 = vmatpush1.bf16.msra.mxu0 %v125
    %145 = vmatprep.subr.bf16.mxu0 0
    %146 = vmatpush1.bf16.msra.mxu0 %v126
    %147 = vmatprep.subr.bf16.mxu0 0
    %148 = vmatpush1.bf16.msra.mxu0 %v127
    %149 = vmatprep.subr.bf16.mxu0 0
    %150 = vmatpush1.bf16.msra.mxu0 %v128
    %151 = vmatprep.subr.bf16.mxu0 0
    %152 = vmatpush1.bf16.msra.mxu0 %v129
    %153 = vmatprep.subr.bf16.mxu0 0
    %154 = vmatpush1.bf16.msra.mxu0 %v130
    %155 = vmatprep.subr.bf16.mxu0 0
    %156 = vmatpush1.bf16.msra.mxu0 0
    %157 = vmatprep.subr.bf16.mxu0 0
    %158 = vmatpush1.bf16.msra.mxu0 0
    %159 = vmatprep.subr.bf16.mxu0 0
    %160 = vmatpush1.bf16.msra.mxu0 0
    %161 = vmatprep.subr.bf16.mxu0 0
    %162 = vmatpush1.bf16.msra.mxu0 0
    %163 = vmatprep.subr.bf16.mxu0 0
    %164 = vmatpush1.bf16.msra.mxu0 0
    %165 = vmatprep.subr.bf16.mxu0 0
    %166 = vmatpush1.bf16.msra.mxu0 0
    %167 = vmatprep.subr.bf16.mxu0 0
    %168 = vmatpush1.bf16.msra.mxu0 0
    %169 = vmatprep.subr.bf16.mxu0 0
    %170 = vmatpush1.bf16.msra.mxu0 0
    %171 = vmatprep.mubr.bf16.mxu0 0
    %172 = vmatmul.mubr.bf16.gmra.mrb[0].mxu0 %v87
    %v173 = vpop.f32.mrb[0].mxu0
    %v174 = vadd.f32 0.0, %v173
    %v175 = vpop.f32.mrb[0].mxu0
    %v176 = vpop.f32.mrb[0].mxu0
    %v177 = vadd.f32 0.0, %v176
    %v178 = vpop.f32.mrb[0].mxu0
    %179 = vmatprep.mubr.bf16.mxu0 0
    %180 = vmatmul.mubr.bf16.gmra.mrb[0].mxu0 %v88
    %v181 = vpop.f32.mrb[0].mxu0
    %v182 = vadd.f32 0.0, %v181
    %v183 = vpop.f32.mrb[0].mxu0
    %v184 = vpop.f32.mrb[0].mxu0
    %v185 = vadd.f32 0.0, %v184
    %v186 = vpop.f32.mrb[0].mxu0
    %187 = vdwg.mxu0
    %v188 = vadd.f32 %v75, %v174
    %v189 = vadd.f32 %v76, %v177
    %v190 = vadd.f32 %v77, %v182
    %v191 = vadd.f32 %v78, %v185
    %192 = vst [vmem:[#allocation2] sm:$0xff] %v188
    %193 = vst [vmem:[#allocation2 + $0x8] sm:$0xff] %v189
    %194 = vst [vmem:[#allocation2 + $0x10] sm:$0xff] %v190
    %195 = vst [vmem:[#allocation2 + $0x18] sm:$0xff] %v191
    %s196 = smul.u32 0, 32
    %v197 = vlaneseq
    %v198 = vshrl.u32 %v197, 7
    %v199 = vadd.s32 %v198, 8
    %v200 = vadd.s32 %v198, 16
    %v201 = vadd.s32 %v198, 24
    %v202 = vstv %s196
    %v203 = vadd.s32 %v202, %v198
    %v204 = vadd.s32 %v202, %v199
    %v205 = vadd.s32 %v202, %v200
    %v206 = vadd.s32 %v202, %v201
    %vm207 = vcmp.lt.s32.totalorder %v203, 0
    %v208 = vsub.s32 0, %v203
    %v209 = vsel %vm207, %v208, %v203
    %v210 = vshrl.u32 %v209, 3
    %v211 = vand.u32 %v209, 7
    %v212 = vsub.s32 0, %v211
    %v213 = vsel %vm207, %v212, %v211
    %vm214 = vcmp.lt.s32.totalorder %v204, 0
    %v215 = vsub.s32 0, %v204
    %v216 = vsel %vm214, %v215, %v204
    %v217 = vshrl.u32 %v216, 3
    %v218 = vand.u32 %v216, 7
    %v219 = vsub.s32 0, %v218
    %v220 = vsel %vm214, %v219, %v218
    %vm221 = vcmp.lt.s32.totalorder %v205, 0
    %v222 = vsub.s32 0, %v205
    %v223 = vsel %vm221, %v222, %v205
    %v224 = vshrl.u32 %v223, 3
    %v225 = vand.u32 %v223, 7
    %v226 = vsub.s32 0, %v225
    %v227 = vsel %vm221, %v226, %v225
    %vm228 = vcmp.lt.s32.totalorder %v206, 0
    %v229 = vsub.s32 0, %v206
    %v230 = vsel %vm228, %v229, %v206
    %v231 = vshrl.u32 %v230, 3
    %v232 = vand.u32 %v230, 7
    %v233 = vsub.s32 0, %v232
    %v234 = vsel %vm228, %v233, %v232
    %vm235 = vcmp.ne.s32.totalorder %v213, 0
    %vm236 = vcmp.ne.s32.totalorder %v220, 0
    %vm237 = vcmp.ne.s32.totalorder %v227, 0
    %vm238 = vcmp.ne.s32.totalorder %v234, 0
    %vm239 = vcmp.lt.s32.totalorder %v213, 0
    %vm240 = vcmp.lt.s32.totalorder %v220, 0
    %vm241 = vcmp.lt.s32.totalorder %v227, 0
    %vm242 = vcmp.lt.s32.totalorder %v234, 0
    %vm243 = vmand %vm239, %vm235
    %vm244 = vmand %vm240, %vm236
    %vm245 = vmand %vm241, %vm237
    %vm246 = vmand %vm242, %vm238
    %v247 = vadd.s32 %v213, 8
    %v248 = vadd.s32 %v220, 8
    %v249 = vadd.s32 %v227, 8
    %v250 = vadd.s32 %v234, 8
    %v251 = vsel %vm243, %v247, %v213
    %v252 = vsel %vm244, %v248, %v220
    %v253 = vsel %vm245, %v249, %v227
    %v254 = vsel %vm246, %v250, %v234
    %vm255 = vcmp.eq.s32.totalorder %v251, 0
    %vm256 = vcmp.eq.s32.totalorder %v252, 0
    %vm257 = vcmp.eq.s32.totalorder %v253, 0
    %vm258 = vcmp.eq.s32.totalorder %v254, 0
    %vm259 = vcmp.lt.s32.totalorder %v203, 32
    %vm260 = vcmp.lt.s32.totalorder %v204, 32
    %vm261 = vcmp.lt.s32.totalorder %v205, 32
    %vm262 = vcmp.lt.s32.totalorder %v206, 32
    %vm263 = vmand %vm255, %vm259
    %vm264 = vmand %vm256, %vm260
    %vm265 = vmand %vm257, %vm261
    %vm266 = vmand %vm258, %vm262
    %p267 = scmp.eq.s32.totalorder 0, 0
    // Predicated region
    $region26: #{_forward_impl.1} parent=1 // pred_check
      %p268 = pneg %p267
    $region27: #{_forward_impl.1} parent=1 // pred_check_branch
      %270 = sbr.rel (%p268) target = $region29
    $region28: #{_forward_impl.1} parent=1 // pred_region
      %v271 = vunpack.c.l.bf16 %v55
      %v272 = vunpack.c.l.bf16 %v56
      %v273 = vunpack.c.l.bf16 %v57
      %v274 = vunpack.c.l.bf16 %v58
      %v275 = vand.u32 2147483647, %v271
      %v276 = vand.u32 2147483647, %v272
      %v277 = vand.u32 2147483647, %v273
      %v278 = vand.u32 2147483647, %v274
      %v279 = vsel %vm263, 1, 0
      %v280 = vsel %vm264, 1, 0
      %v281 = vsel %vm265, 1, 0
      %v282 = vsel %vm266, 1, 0
      %vm283 = vcmp.eq.s32.totalorder %v279, 1
      %vm284 = vcmp.eq.s32.totalorder %v280, 1
      %vm285 = vcmp.eq.s32.totalorder %v281, 1
      %vm286 = vcmp.eq.s32.totalorder %v282, 1
      %v287 = vsel %vm283, %v275, 0.0
      %v288 = vsel %vm284, %v276, 0.0
      %v289 = vsel %vm285, %v277, 0.0
      %v290 = vsel %vm286, %v278, 0.0
      %v291 = vadd.f32 %v287, %v288
      %v292 = vadd.f32 %v291, %v289
      %v293 = vadd.f32 %v292, %v290
      %v294 = vrot.slane %v293, 4
      %v295 = vadd.f32 %v293, %v294
      %v296 = vrot.slane %v295, 2
      %v297 = vadd.f32 %v295, %v296
      %v298 = vrot.slane %v297, 1
      %v299 = vadd.f32 %v297, %v298
      %v300 = vadd.f32 %v299, 0.0
      %v301 = vld [vmem:[%s4] sm:$0x1]
      %v302 = vadd.f32 %v301, %v300
      %303 = vst [vmem:[%s4] sm:$0x1] %v302
    $region29: #{_forward_impl.1} parent=1 // pred_fallthru
      _
    // Predicated region
    $region30: #{_forward_impl.1} parent=1 // pred_check
      %p304 = pneg %p46
    $region31: #{_forward_impl.1} parent=1 // pred_check_branch
      %306 = sbr.rel (%p304) target = $region33
    $region32: #{_forward_impl.1} parent=1 // pred_region
      %v307 = vld [vmem:[#allocation2] sm:$0xff]
      %v308 = vld [vmem:[#allocation2 + $0x8] sm:$0xff]
      %v309 = vld [vmem:[#allocation2 + $0x10] sm:$0xff]
      %v310 = vld [vmem:[#allocation2 + $0x18] sm:$0xff]
      %v311 = vld [vmem:[%s2] sm:$0x1]
      %v313 = vlaneseq
      %v314 = vshrl.u32 %v313, 7
      %v315 = vsub.s32 0, %v314
      %v316 = vrot.slane %v311, %v315
      %v318 = vadd.f32 %v307, %v316
      %v319 = vadd.f32 %v308, %v316
      %v320 = vadd.f32 %v309, %v316
      %v321 = vadd.f32 %v310, %v316
      %322 = vst [vmem:[#allocation8] sm:$0xff] %v318
      %323 = vst [vmem:[#allocation8 + $0x8] sm:$0xff] %v319
      %324 = vst [vmem:[#allocation8 + $0x10] sm:$0xff] %v320
      %325 = vst [vmem:[#allocation8 + $0x18] sm:$0xff] %v321
      %v326 = vand.u32 2147483647, %v318
      %v327 = vand.u32 2147483647, %v319
      %v328 = vand.u32 2147483647, %v320
      %v329 = vand.u32 2147483647, %v321
      %v330 = vsel %vm263, 1, 0
      %v331 = vsel %vm264, 1, 0
      %v332 = vsel %vm265, 1, 0
      %v333 = vsel %vm266, 1, 0
      %vm334 = vcmp.eq.s32.totalorder %v330, 1
      %vm335 = vcmp.eq.s32.totalorder %v331, 1
      %vm336 = vcmp.eq.s32.totalorder %v332, 1
      %vm337 = vcmp.eq.s32.totalorder %v333, 1
      %v338 = vsel %vm334, %v326, 0.0
      %v339 = vsel %vm335, %v327, 0.0
      %v340 = vsel %vm336, %v328, 0.0
      %v341 = vsel %vm337, %v329, 0.0
      %v342 = vadd.f32 %v338, %v339
      %v343 = vadd.f32 %v342, %v340
      %v344 = vadd.f32 %v343, %v341
      %v345 = vrot.slane %v344, 4
      %v346 = vadd.f32 %v344, %v345
      %v347 = vrot.slane %v346, 2
      %v348 = vadd.f32 %v346, %v347
      %v349 = vrot.slane %v348, 1
      %v350 = vadd.f32 %v348, %v349
      %v351 = vadd.f32 %v350, 0.0
      %v352 = vld [vmem:[%s4 + $0x1] sm:$0x1]
      %v353 = vadd.f32 %v352, %v351
      %354 = vst [vmem:[%s4 + $0x1] sm:$0x1] %v353
    $region33: #{_forward_impl.1} parent=1 // pred_fallthru
      _
    // Predicated region
    $region34: #{_forward_impl.1} parent=1 // pred_check
      _
    $region35: #{_forward_impl.1} parent=1 // pred_check_branch
      %356 = sbr.rel (0) target = $region37
    $region36: #{_forward_impl.1} parent=1 // pred_region
      %s358 = ssub.s32 512, 512
      %359 = vsyncadd [#allocation5], %s358
      %s360 = sshll.u32 [#allocation8], 4
      %s361 = int_to_ptr.vmem [resolvable:$true] %s360
      %366 = dma.vmem_to_hbm [thread:$0]  %s361, 512, %s3, [#allocation5], 128, 128, 8
    $region37: #{_forward_impl.1} parent=1 // pred_fallthru
      _
    // Predicated region
    $region38: #{_forward_impl.1} parent=1 // pred_check
      _
    $region39: #{_forward_impl.1} parent=1 // pred_check_branch
      %368 = sbr.rel (0) target = $region41
    $region40: #{_forward_impl.1} parent=1 // pred_region
      _
    $region41: #{_forward_impl.1} parent=1 // pred_fallthru
      _
    // Predicated region
    $region42: #{_forward_impl.1} parent=1 // pred_check
      _
    $region43: #{_forward_impl.1} parent=1 // pred_check_branch
      %370 = sbr.rel (0) target = $region45
    $region44: #{_forward_impl.1} parent=1 // pred_region
      %371 = dma.done [#allocation5], 512
    $region45: #{_forward_impl.1} parent=1 // pred_fallthru
      _
    // Predicated region
    $region46: #{_forward_impl.1} parent=1 // pred_check
      _
    $region47: #{_forward_impl.1} parent=1 // pred_check_branch
      %373 = sbr.rel (0) target = $region49
    $region48: #{_forward_impl.1} parent=1 // pred_region
      _
    $region49: #{_forward_impl.1} parent=1 // pred_fallthru
      _
    %374 = vsyncpa [#allocation4], 1
    %375 = vsyncpa [#allocation7], 1
    %376 = vsyncpa [#allocation5], 1

</llo_original>
